<compile_context>
chip_gen: v7x
topology: tpu7x:2x2x1
jax: 0.10.0
libtpu: 0.0.40
codegen_flags: <defaults>
</compile_context>

<pallas_src>
import functools

import numpy as np
import jax
import jax.numpy as jnp
from jax.experimental import pallas as pl
from jax.experimental.pallas import tpu as pltpu


def rounded_square_root(x):
    return int(round(x ** 0.5))


def _round_up(x, m):
    return (x + m - 1) // m * m


# ------------------------------------------------------------------ layout --
# Packing order of the 13 parameter tensors inside the single VMEM buffer.
_PARAM_ORDER = ("w1a", "b1a", "w1b", "b1b", "w2a", "b2a", "w2b", "b2b",
                "gamma", "w3a", "b3a", "w3b", "b3b")


def _packed_layout(S, D, h1, h2, h3, cs, cd, nout):
    """Static row offsets / shapes of every (expanded) parameter tensor."""
    shapes = {
        "w1a": (S * D, S * h1),     # kron(I_S, W1a)  : compress1 layer 1
        "b1a": (1, S * h1),
        "w1b": (S * h1, S * cd),    # kron(I_S, W1b)  : compress1 layer 2
        "b1b": (1, S * cd),
        "w2a": (S * cd, h2 * cd),   # kron(W2a, I_cd) : compress2 layer 1
        "b2a": (1, h2 * cd),
        "w2b": (h2 * cd, cs * cd),  # kron(W2b, I_cd) : compress2 layer 2
        "b2b": (1, cs * cd),
        "gamma": (1, cs * cd),      # RMSNorm weight (already in k*cd+c order)
        "w3a": (cs * cd, h3),       # head layer 1
        "b3a": (1, h3),
        "w3b": (h3, nout),          # head layer 2
        "b3b": (1, nout),
    }
    layout = {}
    row = 0
    for name in _PARAM_ORDER:
        layout[name] = (row, shapes[name])
        row += _round_up(shapes[name][0], 8)     # keep every view sublane-aligned
    total_rows = _round_up(row, 8)
    lanes = _round_up(max(s[1] for s in shapes.values()), 128)
    return layout, total_rows, lanes


# ------------------------------------------------------------------ kernel --

def _fused_forward_kernel(p_ref, a_ref, b_ref, o_ref, *, layout, eps):
    """Whole forward pass, fully VMEM-resident, six matmuls, no loops.

    p_ref : (rows, lanes) packed/expanded parameters
    a_ref : (B, S*D) emb1 flattened (row-major, free reshape)
    b_ref : (B, S*D) emb2 flattened
    o_ref : (B, nout) logits (lane-sparse; forced by the model)
    """
    f32 = jnp.float32

    def view(name):                       # static, sublane-aligned VMEM view
        r0, (rows, cols) = layout[name]
        return p_ref[r0:r0 + rows, 0:cols]

    def bias(name):                       # (1, cols), f32 for elementwise adds
        return view(name).astype(f32)

    def mm(x, name):                      # MXU consumes params' native dtype
        w = view(name)
        return jnp.dot(x.astype(w.dtype), w, preferred_element_type=f32)

    # x = emb1 - emb2, laid out (B, S*D); elementwise math kept in f32.
    x = a_ref[...].astype(f32) - b_ref[...].astype(f32)

    # compress_d_model: per-position MLP over D, batched over (B, S) via the
    # block-diagonal weights: (B, S*D) -> (B, S*h1) -> (B, S*cd).
    h = jax.nn.gelu(mm(x, "w1a") + bias("b1a"), approximate=True)
    y = mm(h, "w1b") + bias("b1b")

    # compress_seq_len: MLP over S per channel c.  The reference's
    # permute(0,2,1) / permute-back pair is absorbed into the kron-expanded
    # weights, so this is two more plain matmuls:
    # (B, S*cd) -> (B, h2*cd) -> (B, cs*cd); output lanes already k*cd + c,
    # i.e. the reference reshape(B, -1) order.
    t = jax.nn.gelu(mm(y, "w2a") + bias("b2a"), approximate=True)
    z = mm(t, "w2b") + bias("b2b")

    # RMSNorm over the cs*cd features of each batch row (rsqrt -> EUP).
    ms = jnp.mean(z * z, axis=-1, keepdims=True)
    zn = z * jax.lax.rsqrt(ms + eps) * bias("gamma")

    # Head MLP -> logits; single full-tile store.
    u = jax.nn.gelu(mm(zn, "w3a") + bias("b3a"), approximate=True)
    logits = mm(u, "w3b") + bias("b3b")
    o_ref[...] = logits.astype(o_ref.dtype)


# ----------------------------------------------------------------- wrapper --

def _vmem_spec():
    return pl.BlockSpec(memory_space=pltpu.MemorySpace.VMEM)


def the_model_forward(packed, contig1, contig2, emb1, emb2, *, layout, eps=1e-6):
    # contig1 / contig2 are unused by the reference forward pass.
    del contig1, contig2
    B, S, D = emb1.shape
    nout = layout["w3b"][1][1]

    # Row-major metadata reshapes only; no data movement, no pre-kernel layout ops.
    a = emb1.reshape(B, S * D)
    b = emb2.reshape(B, S * D)

    kernel = functools.partial(_fused_forward_kernel, layout=layout, eps=eps)
    logits = pl.pallas_call(
        kernel,
        out_shape=jax.ShapeDtypeStruct((B, nout), emb1.dtype),
        in_specs=[_vmem_spec()] * 3,
        out_specs=_vmem_spec(),
    )(packed, a, b)
    return {"logits": logits}


# ------------------------------------------------------------- param setup --

def _init_linear(key, fan_in, fan_out, dtype):
    kw, kb = jax.random.split(key)
    bound = 1.0 / (fan_in ** 0.5)
    w = jax.random.uniform(kw, (fan_in, fan_out), dtype, -bound, bound)
    b = jax.random.uniform(kb, (1, fan_out), dtype, -bound, bound)
    return w, b


def init_params(key, cfg):
    d_emb = cfg["d_emb"]
    cs, cd = cfg["cs"], cfg["cd"]
    nout = cfg["n_output_values"]
    seqlen = cfg["seqlen"] + 1 if cfg["add_cls"] else cfg["seqlen"]
    dtype = cfg["dtype"]

    h1 = rounded_square_root(d_emb * cd)
    h2 = rounded_square_root(seqlen * cs)
    h3 = rounded_square_root(cs * cd * nout)

    k1, k2, k3, k4, k5, k6 = jax.random.split(key, 6)
    return {
        "compress1": (*_init_linear(k1, d_emb, h1, dtype),
                      *_init_linear(k2, h1, cd, dtype)),
        "compress2": (*_init_linear(k3, seqlen, h2, dtype),
                      *_init_linear(k4, h2, cs, dtype)),
        "norm_emb": jnp.ones((1, cs * cd), dtype),
        "head": (*_init_linear(k5, cs * cd, h3, dtype),
                 *_init_linear(k6, h3, nout, dtype)),
    }


def pack_params(params, cfg):
    """One-time, host-side layout prep: kron-expand, tile biases and pack all
    13 parameter tensors into a single sublane-aligned (rows, 128) buffer."""
    d_emb = cfg["d_emb"]
    cs, cd = cfg["cs"], cfg["cd"]
    nout = cfg["n_output_values"]
    S = cfg["seqlen"] + 1 if cfg["add_cls"] else cfg["seqlen"]
    h1 = rounded_square_root(d_emb * cd)
    h2 = rounded_square_root(S * cs)
    h3 = rounded_square_root(cs * cd * nout)

    w1a, b1a, w1b, b1b = params["compress1"]
    w2a, b2a, w2b, b2b = params["compress2"]
    gamma = params["norm_emb"]
    w3a, b3a, w3b, b3b = params["head"]
    dtype = w1a.dtype

    def as_np(x):
        return np.asarray(jnp.asarray(x, jnp.float32))

    eye_s = np.eye(S, dtype=np.float32)
    eye_c = np.eye(cd, dtype=np.float32)
    mats = {
        "w1a": np.kron(eye_s, as_np(w1a)),
        "b1a": np.tile(as_np(b1a), (1, S)),
        "w1b": np.kron(eye_s, as_np(w1b)),
        "b1b": np.tile(as_np(b1b), (1, S)),
        "w2a": np.kron(as_np(w2a), eye_c),
        "b2a": np.repeat(as_np(b2a), cd, axis=1),
        "w2b": np.kron(as_np(w2b), eye_c),
        "b2b": np.repeat(as_np(b2b), cd, axis=1),
        "gamma": as_np(gamma).reshape(1, cs * cd),
        "w3a": as_np(w3a),
        "b3a": as_np(b3a),
        "w3b": as_np(w3b),
        "b3b": as_np(b3b),
    }

    layout, rows, lanes = _packed_layout(S, d_emb, h1, h2, h3, cs, cd, nout)
    buf = np.zeros((rows, lanes), np.float32)
    for name, m in mats.items():
        r0, (r, c) = layout[name]
        assert m.shape == (r, c), (name, m.shape, (r, c))
        buf[r0:r0 + r, :c] = m
    return jnp.asarray(buf, dtype=dtype), layout


# ----------------------------------------------------------------- reference -

def _reference_forward(params, emb1, emb2, eps=1e-6):
    """Pure-JAX reference following the PyTorch module (same assumptions)."""
    w1a, b1a, w1b, b1b = params["compress1"]
    w2a, b2a, w2b, b2b = params["compress2"]
    gamma = params["norm_emb"]
    w3a, b3a, w3b, b3b = params["head"]
    with jax.default_matmul_precision("highest"):
        x = emb1 - emb2                                            # (B,S,D)
        h = jax.nn.gelu(x @ w1a + b1a, approximate=True)           # (B,S,h1)
        y = h @ w1b + b1b                                          # (B,S,cd)
        yp = jnp.transpose(y, (0, 2, 1))                           # (B,cd,S)
        t = jax.nn.gelu(yp @ w2a + b2a, approximate=True)          # (B,cd,h2)
        z = t @ w2b + b2b                                          # (B,cd,cs)
        z = jnp.transpose(z, (0, 2, 1)).reshape(emb1.shape[0], -1) # (B,cs*cd)
        zn = z * jax.lax.rsqrt(jnp.mean(z * z, -1, keepdims=True) + eps) * gamma
        u = jax.nn.gelu(zn @ w3a + b3a, approximate=True)
        return u @ w3b + b3b


# --------------------------------------------------------------------- main --

if __name__ == "__main__":
    cfg = {
        "d_emb": 32,
        "seqlen": 8,
        "add_cls": False,
        "cs": 4,
        "cd": 4,
        "n_output_values": 8,
        "dropout": 0.0,
        "dtype": jnp.float32,
    }
    B = 2
    S = cfg["seqlen"]
    D = cfg["d_emb"]

    key = jax.random.PRNGKey(0)
    kp, k1, k2 = jax.random.split(key, 3)
    params = init_params(kp, cfg)
    packed, layout = pack_params(params, cfg)          # one-time layout prep

    emb1 = jax.random.normal(k1, (B, S, D), cfg["dtype"])
    emb2 = jax.random.normal(k2, (B, S, D), cfg["dtype"])
    contig1 = jnp.zeros((B, S), jnp.int32)             # unused by forward
    contig2 = jnp.zeros((B, S), jnp.int32)             # unused by forward

    fwd = jax.jit(functools.partial(the_model_forward, layout=layout, eps=1e-6))
    out = fwd(packed, contig1, contig2, emb1, emb2)
    logits = jax.block_until_ready(out["logits"])

    assert logits.shape == (B, cfg["n_output_values"])
    assert bool(jnp.all(jnp.isfinite(logits)))

    ref = _reference_forward(params, emb1, emb2)
    max_err = float(jnp.max(jnp.abs(logits - ref)))
    assert jnp.allclose(logits, ref, atol=5e-2, rtol=5e-2), max_err

    print("KERNEL_OK")
</pallas_src>

<mosaic_0001>
module attributes {stable_mosaic.version = 11 : i64} {
  func.func @_fused_forward_kernel(%arg0: memref<488x128xf32, #tpu.memory_space<vmem>>, %arg1: memref<2x256xf32, #tpu.memory_space<vmem>>, %arg2: memref<2x256xf32, #tpu.memory_space<vmem>>, %arg3: memref<2x8xf32, #tpu.memory_space<vmem>>) attributes {dimension_semantics = [], scalar_prefetch = 0 : i64, scratch_operands = 0 : i64, tpu.core_type = #tpu.core_type<tc>} {
    %c0 = arith.constant 0 : index
    %c0_0 = arith.constant 0 : index
    %0 = vector.load %arg1[%c0, %c0_0] : memref<2x256xf32, #tpu.memory_space<vmem>>, vector<2x256xf32>
    %c0_1 = arith.constant 0 : index
    %c0_2 = arith.constant 0 : index
    %1 = vector.load %arg2[%c0_1, %c0_2] : memref<2x256xf32, #tpu.memory_space<vmem>>, vector<2x256xf32>
    %2 = arith.subf %0, %1 : vector<2x256xf32>
    %c0_3 = arith.constant 0 : index
    %c0_4 = arith.constant 0 : index
    %3 = vector.load %arg0[%c0_3, %c0_4] : memref<488x128xf32, #tpu.memory_space<vmem>>, vector<256x88xf32>
    %cst = arith.constant dense<0.000000e+00> : vector<2x88xf32>
    %4 = tpu.matmul %2, %3, %cst {dimension_numbers = #tpu.dot_dimension_numbers<[1], [0], [0], [1], [0, 0, 1, 1], [], []>} : vector<2x256xf32>, vector<256x88xf32>, vector<2x88xf32> -> vector<2x88xf32>
    %c256 = arith.constant 256 : index
    %c0_5 = arith.constant 0 : index
    %5 = vector.load %arg0[%c256, %c0_5] : memref<488x128xf32, #tpu.memory_space<vmem>>, vector<1x88xf32>
    %6 = vector.broadcast %5 : vector<1x88xf32> to vector<2x88xf32>
    %7 = arith.addf %4, %6 : vector<2x88xf32>
    %8 = arith.mulf %7, %7 : vector<2x88xf32>
    %9 = arith.mulf %7, %8 : vector<2x88xf32>
    %cst_6 = arith.constant 4.471500e-02 : f32
    %10 = vector.broadcast %cst_6 : f32 to vector<2x88xf32>
    %11 = arith.mulf %10, %9 : vector<2x88xf32>
    %12 = arith.addf %7, %11 : vector<2x88xf32>
    %cst_7 = arith.constant 0.797884583 : f32
    %13 = vector.broadcast %cst_7 : f32 to vector<2x88xf32>
    %14 = arith.mulf %13, %12 : vector<2x88xf32>
    %15 = math.tanh %14 : vector<2x88xf32>
    %cst_8 = arith.constant 1.000000e+00 : f32
    %16 = vector.broadcast %cst_8 : f32 to vector<2x88xf32>
    %17 = arith.addf %16, %15 : vector<2x88xf32>
    %cst_9 = arith.constant 5.000000e-01 : f32
    %18 = vector.broadcast %cst_9 : f32 to vector<2x88xf32>
    %19 = arith.mulf %18, %17 : vector<2x88xf32>
    %20 = arith.mulf %7, %19 : vector<2x88xf32>
    %c264 = arith.constant 264 : index
    %c0_10 = arith.constant 0 : index
    %21 = vector.load %arg0[%c264, %c0_10] : memref<488x128xf32, #tpu.memory_space<vmem>>, vector<88x32xf32>
    %cst_11 = arith.constant dense<0.000000e+00> : vector<2x32xf32>
    %22 = tpu.matmul %20, %21, %cst_11 {dimension_numbers = #tpu.dot_dimension_numbers<[1], [0], [0], [1], [0, 0, 1, 1], [], []>} : vector<2x88xf32>, vector<88x32xf32>, vector<2x32xf32> -> vector<2x32xf32>
    %c352 = arith.constant 352 : index
    %c0_12 = arith.constant 0 : index
    %23 = vector.load %arg0[%c352, %c0_12] : memref<488x128xf32, #tpu.memory_space<vmem>>, vector<1x32xf32>
    %24 = vector.broadcast %23 : vector<1x32xf32> to vector<2x32xf32>
    %25 = arith.addf %22, %24 : vector<2x32xf32>
    %c360 = arith.constant 360 : index
    %c0_13 = arith.constant 0 : index
    %26 = vector.load %arg0[%c360, %c0_13] : memref<488x128xf32, #tpu.memory_space<vmem>>, vector<32x24xf32>
    %cst_14 = arith.constant dense<0.000000e+00> : vector<2x24xf32>
    %27 = tpu.matmul %25, %26, %cst_14 {dimension_numbers = #tpu.dot_dimension_numbers<[1], [0], [0], [1], [0, 0, 1, 1], [], []>} : vector<2x32xf32>, vector<32x24xf32>, vector<2x24xf32> -> vector<2x24xf32>
    %c392 = arith.constant 392 : index
    %c0_15 = arith.constant 0 : index
    %28 = vector.load %arg0[%c392, %c0_15] : memref<488x128xf32, #tpu.memory_space<vmem>>, vector<1x24xf32>
    %29 = vector.broadcast %28 : vector<1x24xf32> to vector<2x24xf32>
    %30 = arith.addf %27, %29 : vector<2x24xf32>
    %31 = arith.mulf %30, %30 : vector<2x24xf32>
    %32 = arith.mulf %30, %31 : vector<2x24xf32>
    %cst_16 = arith.constant 4.471500e-02 : f32
    %33 = vector.broadcast %cst_16 : f32 to vector<2x24xf32>
    %34 = arith.mulf %33, %32 : vector<2x24xf32>
    %35 = arith.addf %30, %34 : vector<2x24xf32>
    %cst_17 = arith.constant 0.797884583 : f32
    %36 = vector.broadcast %cst_17 : f32 to vector<2x24xf32>
    %37 = arith.mulf %36, %35 : vector<2x24xf32>
    %38 = math.tanh %37 : vector<2x24xf32>
    %cst_18 = arith.constant 1.000000e+00 : f32
    %39 = vector.broadcast %cst_18 : f32 to vector<2x24xf32>
    %40 = arith.addf %39, %38 : vector<2x24xf32>
    %cst_19 = arith.constant 5.000000e-01 : f32
    %41 = vector.broadcast %cst_19 : f32 to vector<2x24xf32>
    %42 = arith.mulf %41, %40 : vector<2x24xf32>
    %43 = arith.mulf %30, %42 : vector<2x24xf32>
    %c400 = arith.constant 400 : index
    %c0_20 = arith.constant 0 : index
    %44 = vector.load %arg0[%c400, %c0_20] : memref<488x128xf32, #tpu.memory_space<vmem>>, vector<24x16xf32>
    %cst_21 = arith.constant dense<0.000000e+00> : vector<2x16xf32>
    %45 = tpu.matmul %43, %44, %cst_21 {dimension_numbers = #tpu.dot_dimension_numbers<[1], [0], [0], [1], [0, 0, 1, 1], [], []>} : vector<2x24xf32>, vector<24x16xf32>, vector<2x16xf32> -> vector<2x16xf32>
    %c424 = arith.constant 424 : index
    %c0_22 = arith.constant 0 : index
    %46 = vector.load %arg0[%c424, %c0_22] : memref<488x128xf32, #tpu.memory_space<vmem>>, vector<1x16xf32>
    %47 = vector.broadcast %46 : vector<1x16xf32> to vector<2x16xf32>
    %48 = arith.addf %45, %47 : vector<2x16xf32>
    %49 = arith.mulf %48, %48 : vector<2x16xf32>
    %cst_23 = arith.constant dense<0.000000e+00> : vector<2xf32>
    %50 = vector.multi_reduction <add>, %49, %cst_23 [1] : vector<2x16xf32> to vector<2xf32>
    %51 = vector.shape_cast %50 : vector<2xf32> to vector<2x1xf32>
    %cst_24 = arith.constant 1.600000e+01 : f32
    %52 = vector.broadcast %cst_24 : f32 to vector<2x1xf32>
    %53 = arith.divf %51, %52 : vector<2x1xf32>
    %cst_25 = arith.constant 9.99999997E-7 : f32
    %54 = vector.broadcast %cst_25 : f32 to vector<2x1xf32>
    %55 = arith.addf %53, %54 : vector<2x1xf32>
    %56 = math.rsqrt %55 : vector<2x1xf32>
    %57 = vector.broadcast %56 : vector<2x1xf32> to vector<2x16xf32>
    %58 = arith.mulf %48, %57 : vector<2x16xf32>
    %c432 = arith.constant 432 : index
    %c0_26 = arith.constant 0 : index
    %59 = vector.load %arg0[%c432, %c0_26] : memref<488x128xf32, #tpu.memory_space<vmem>>, vector<1x16xf32>
    %60 = vector.broadcast %59 : vector<1x16xf32> to vector<2x16xf32>
    %61 = arith.mulf %58, %60 : vector<2x16xf32>
    %c440 = arith.constant 440 : index
    %c0_27 = arith.constant 0 : index
    %62 = vector.load %arg0[%c440, %c0_27] : memref<488x128xf32, #tpu.memory_space<vmem>>, vector<16x11xf32>
    %cst_28 = arith.constant dense<0.000000e+00> : vector<2x11xf32>
    %63 = tpu.matmul %61, %62, %cst_28 {dimension_numbers = #tpu.dot_dimension_numbers<[1], [0], [0], [1], [0, 0, 1, 1], [], []>} : vector<2x16xf32>, vector<16x11xf32>, vector<2x11xf32> -> vector<2x11xf32>
    %c456 = arith.constant 456 : index
    %c0_29 = arith.constant 0 : index
    %64 = vector.load %arg0[%c456, %c0_29] : memref<488x128xf32, #tpu.memory_space<vmem>>, vector<1x11xf32>
    %65 = vector.broadcast %64 : vector<1x11xf32> to vector<2x11xf32>
    %66 = arith.addf %63, %65 : vector<2x11xf32>
    %67 = arith.mulf %66, %66 : vector<2x11xf32>
    %68 = arith.mulf %66, %67 : vector<2x11xf32>
    %cst_30 = arith.constant 4.471500e-02 : f32
    %69 = vector.broadcast %cst_30 : f32 to vector<2x11xf32>
    %70 = arith.mulf %69, %68 : vector<2x11xf32>
    %71 = arith.addf %66, %70 : vector<2x11xf32>
    %cst_31 = arith.constant 0.797884583 : f32
    %72 = vector.broadcast %cst_31 : f32 to vector<2x11xf32>
    %73 = arith.mulf %72, %71 : vector<2x11xf32>
    %74 = math.tanh %73 : vector<2x11xf32>
    %cst_32 = arith.constant 1.000000e+00 : f32
    %75 = vector.broadcast %cst_32 : f32 to vector<2x11xf32>
    %76 = arith.addf %75, %74 : vector<2x11xf32>
    %cst_33 = arith.constant 5.000000e-01 : f32
    %77 = vector.broadcast %cst_33 : f32 to vector<2x11xf32>
    %78 = arith.mulf %77, %76 : vector<2x11xf32>
    %79 = arith.mulf %66, %78 : vector<2x11xf32>
    %c464 = arith.constant 464 : index
    %c0_34 = arith.constant 0 : index
    %80 = vector.load %arg0[%c464, %c0_34] : memref<488x128xf32, #tpu.memory_space<vmem>>, vector<11x8xf32>
    %cst_35 = arith.constant dense<0.000000e+00> : vector<2x8xf32>
    %81 = tpu.matmul %79, %80, %cst_35 {dimension_numbers = #tpu.dot_dimension_numbers<[1], [0], [0], [1], [0, 0, 1, 1], [], []>} : vector<2x11xf32>, vector<11x8xf32>, vector<2x8xf32> -> vector<2x8xf32>
    %c480 = arith.constant 480 : index
    %c0_36 = arith.constant 0 : index
    %82 = vector.load %arg0[%c480, %c0_36] : memref<488x128xf32, #tpu.memory_space<vmem>>, vector<1x8xf32>
    %83 = vector.broadcast %82 : vector<1x8xf32> to vector<2x8xf32>
    %84 = arith.addf %81, %83 : vector<2x8xf32>
    %c0_37 = arith.constant 0 : index
    %c0_38 = arith.constant 0 : index
    %85 = vector.load %arg3[%c0_37, %c0_38] : memref<2x8xf32, #tpu.memory_space<vmem>>, vector<2x8xf32>
    tpu.vector_store %arg3[%c0_37, %c0_38], %84 {strides = array<i32>} : memref<2x8xf32, #tpu.memory_space<vmem>>, vector<2x8xf32>,
    return
  }
}

</mosaic_0001>

<llo_original>
// kernel: the_model_forward.1
$region0: #{the_model_forward.1}
  #allocation0 [shape = 'u32[]', space=smem, size = 0x4, offset = 0x4, fixed_abs, tag = 'smem constant byte address 0x4 - core index']
  #allocation1 [shape = 'u32[144,128]{1,0:T(1,128)}', space=vmem, size = 0x12000, scoped, tag = 'internal scratch']
  %s0 = inlined_call_operand.hbm [shape: f32[488,128], index: 0, kind: input, shape index: {}]
  %s1 = inlined_call_operand.vmem [shape: f32[2,256], index: 1, kind: input, shape index: {}]
  %s2 = inlined_call_operand.vmem [shape: f32[2,256], index: 2, kind: input, shape index: {}]
  %s3 = inlined_call_operand.hbm [shape: f32[2,8], index: 3, kind: output, shape index: {}]
  %s4 = sld [smem:[#allocation0]]
  $region26: #{the_model_forward.1} parent=0
    _
  %s6 = ssub.s32 1, %s4
  %s7 = scalar_select 0, %s6, %s4
  $region1: #{the_model_forward.1} parent=0
    #allocation2 [shape = 'u8[249856]{0}', space=vmem, size = 0x3d000, scoped, tag = 'input window, operand 0, single buffered']
    #allocation3 [shape = 's32[1]{0}', space=sflag, size = 0x4, scoped, tag = 'scoped memory for the_model_forward.1']
    #allocation4 [shape = 's32[1]{0}', space=sflag, size = 0x4, scoped, tag = 'scoped memory for the_model_forward.1']
    #allocation5 [shape = 'u8[1024]{0}', space=vmem, size = 0x400, scoped, tag = 'output window, operand 0, single buffered']
    %8 = vsyncpa [#allocation3], 0
    %9 = vsyncpa [#allocation4], 0
    // Predicated region
    $region2: #{the_model_forward.1} parent=1 // pred_check
      _
    $region3: #{the_model_forward.1} parent=1 // pred_check_branch
      %11 = sbr.rel (0) target = $region5
    $region4: #{the_model_forward.1} parent=1 // pred_region
      %s13 = ssub.s32 7808, 7808
      %14 = vsyncadd [#allocation3], %s13
      %s15 = sshll.u32 [#allocation2], 4
      %s16 = int_to_ptr.vmem [resolvable:$true] %s15
      %21 = dma.hbm_to_vmem [thread:$0]  %s0, 7808, %s16, [#allocation3], 128, 128, 8
    $region5: #{the_model_forward.1} parent=1 // pred_fallthru
      _
    // Predicated region
    $region6: #{the_model_forward.1} parent=1 // pred_check
      _
    $region7: #{the_model_forward.1} parent=1 // pred_check_branch
      %23 = sbr.rel (0) target = $region9
    $region8: #{the_model_forward.1} parent=1 // pred_region
      _
    $region9: #{the_model_forward.1} parent=1 // pred_fallthru
      _
    // Predicated region
    $region10: #{the_model_forward.1} parent=1 // pred_check
      _
    $region11: #{the_model_forward.1} parent=1 // pred_check_branch
      %25 = sbr.rel (0) target = $region13
    $region12: #{the_model_forward.1} parent=1 // pred_region
      _
    $region13: #{the_model_forward.1} parent=1 // pred_fallthru
      _
    // Predicated region
    $region14: #{the_model_forward.1} parent=1 // pred_check
      _
    $region15: #{the_model_forward.1} parent=1 // pred_check_branch
      %27 = sbr.rel (0) target = $region17
    $region16: #{the_model_forward.1} parent=1 // pred_region
      %28 = dma.done [#allocation3], 7808
    $region17: #{the_model_forward.1} parent=1 // pred_fallthru
      _
    %v29 = vld [vmem:[%s1] sm:$0xf]
    %v30 = vld [vmem:[%s2] sm:$0xf]
    %v31 = vsub.f32 %v29, %v30
    %v32 = vld [vmem:[#allocation2] sm:$0xff]
    %v33 = vld [vmem:[#allocation2 + $0x8] sm:$0xff]
    %v34 = vld [vmem:[#allocation2 + $0x10] sm:$0xff]
    %v35 = vld [vmem:[#allocation2 + $0x18] sm:$0xff]
    %v36 = vld [vmem:[#allocation2 + $0x20] sm:$0xff]
    %v37 = vld [vmem:[#allocation2 + $0x28] sm:$0xff]
    %v38 = vld [vmem:[#allocation2 + $0x30] sm:$0xff]
    %v39 = vld [vmem:[#allocation2 + $0x38] sm:$0xff]
    %v40 = vld [vmem:[#allocation2 + $0x40] sm:$0xff]
    %v41 = vld [vmem:[#allocation2 + $0x48] sm:$0xff]
    %v42 = vld [vmem:[#allocation2 + $0x50] sm:$0xff]
    %v43 = vld [vmem:[#allocation2 + $0x58] sm:$0xff]
    %v44 = vld [vmem:[#allocation2 + $0x60] sm:$0xff]
    %v45 = vld [vmem:[#allocation2 + $0x68] sm:$0xff]
    %v46 = vld [vmem:[#allocation2 + $0x70] sm:$0xff]
    %v47 = vld [vmem:[#allocation2 + $0x78] sm:$0xff]
    %v48 = vld [vmem:[#allocation2 + $0x80] sm:$0xff]
    %v49 = vld [vmem:[#allocation2 + $0x88] sm:$0xff]
    %v50 = vld [vmem:[#allocation2 + $0x90] sm:$0xff]
    %v51 = vld [vmem:[#allocation2 + $0x98] sm:$0xff]
    %v52 = vld [vmem:[#allocation2 + $0xa0] sm:$0xff]
    %v53 = vld [vmem:[#allocation2 + $0xa8] sm:$0xff]
    %v54 = vld [vmem:[#allocation2 + $0xb0] sm:$0xff]
    %v55 = vld [vmem:[#allocation2 + $0xb8] sm:$0xff]
    %v56 = vld [vmem:[#allocation2 + $0xc0] sm:$0xff]
    %v57 = vld [vmem:[#allocation2 + $0xc8] sm:$0xff]
    %v58 = vld [vmem:[#allocation2 + $0xd0] sm:$0xff]
    %v59 = vld [vmem:[#allocation2 + $0xd8] sm:$0xff]
    %v60 = vld [vmem:[#allocation2 + $0xe0] sm:$0xff]
    %v61 = vld [vmem:[#allocation2 + $0xe8] sm:$0xff]
    %v62 = vld [vmem:[#allocation2 + $0xf0] sm:$0xff]
    %v63 = vld [vmem:[#allocation2 + $0xf8] sm:$0xff]
    %v64 = vld [vmem:[#allocation2 + $0x100] sm:$0x1]
    %v65 = vlaneseq
    %v66 = vshrl.u32 %v65, 7
    %v67 = vsub.s32 0, %v66
    %v68 = vrot.slane %v64, %v67
    %v71 = vunpack.c.l.s4 1983009808
    %v72 = vunpack.c.0.s8 %v71
    %v73 = vlaneseq
    %v74 = vshrl.u32 %v73, 7
    %v75 = vsub.s32 %v72, %v74
    %v76 = vrot.slane %v31, %v75
    %v77 = vcombine.high %v76, %v76
    %80 = vmatprep.subr.mxu0 0.0
    %81 = vmatpush1.msra.mxu0 %v32
    %82 = vmatprep.subr.mxu0 0.0
    %83 = vmatpush1.msra.mxu0 %v33
    %84 = vmatprep.subr.mxu0 0.0
    %85 = vmatpush1.msra.mxu0 %v34
    %86 = vmatprep.subr.mxu0 0.0
    %87 = vmatpush1.msra.mxu0 %v35
    %88 = vmatprep.subr.mxu0 0.0
    %89 = vmatpush1.msra.mxu0 %v36
    %90 = vmatprep.subr.mxu0 0.0
    %91 = vmatpush1.msra.mxu0 %v37
    %92 = vmatprep.subr.mxu0 0.0
    %93 = vmatpush1.msra.mxu0 %v38
    %94 = vmatprep.subr.mxu0 0.0
    %95 = vmatpush1.msra.mxu0 %v39
    %96 = vmatprep.subr.mxu0 0.0
    %97 = vmatpush1.msra.mxu0 %v40
    %98 = vmatprep.subr.mxu0 0.0
    %99 = vmatpush1.msra.mxu0 %v41
    %100 = vmatprep.subr.mxu0 0.0
    %101 = vmatpush1.msra.mxu0 %v42
    %102 = vmatprep.subr.mxu0 0.0
    %103 = vmatpush1.msra.mxu0 %v43
    %104 = vmatprep.subr.mxu0 0.0
    %105 = vmatpush1.msra.mxu0 %v44
    %106 = vmatprep.subr.mxu0 0.0
    %107 = vmatpush1.msra.mxu0 %v45
    %108 = vmatprep.subr.mxu0 0.0
    %109 = vmatpush1.msra.mxu0 %v46
    %110 = vmatprep.subr.mxu0 0.0
    %111 = vmatpush1.msra.mxu0 %v47
    %112 = vmatprep.subr.mxu0 0.0
    %113 = vmatpush1.msra.mxu0 %v48
    %114 = vmatprep.subr.mxu0 0.0
    %115 = vmatpush1.msra.mxu0 %v49
    %116 = vmatprep.subr.mxu0 0.0
    %117 = vmatpush1.msra.mxu0 %v50
    %118 = vmatprep.subr.mxu0 0.0
    %119 = vmatpush1.msra.mxu0 %v51
    %120 = vmatprep.subr.mxu0 0.0
    %121 = vmatpush1.msra.mxu0 %v52
    %122 = vmatprep.subr.mxu0 0.0
    %123 = vmatpush1.msra.mxu0 %v53
    %124 = vmatprep.subr.mxu0 0.0
    %125 = vmatpush1.msra.mxu0 %v54
    %126 = vmatprep.subr.mxu0 0.0
    %127 = vmatpush1.msra.mxu0 %v55
    %128 = vmatprep.subr.mxu0 0.0
    %129 = vmatpush1.msra.mxu0 %v56
    %130 = vmatprep.subr.mxu0 0.0
    %131 = vmatpush1.msra.mxu0 %v57
    %132 = vmatprep.subr.mxu0 0.0
    %133 = vmatpush1.msra.mxu0 %v58
    %134 = vmatprep.subr.mxu0 0.0
    %135 = vmatpush1.msra.mxu0 %v59
    %136 = vmatprep.subr.mxu0 0.0
    %137 = vmatpush1.msra.mxu0 %v60
    %138 = vmatprep.subr.mxu0 0.0
    %139 = vmatpush1.msra.mxu0 %v61
    %140 = vmatprep.subr.mxu0 0.0
    %141 = vmatpush1.msra.mxu0 %v62
    %142 = vmatprep.subr.mxu0 0.0
    %143 = vmatpush1.msra.mxu0 %v63
    %144 = vmatprep.mubr.f32.mxu0 %v77
    %145 = vmatmul.mubr.f32.gmra.mrb[0].mxu0 %v76
    %v146 = vpop.f32.mrb[0].mxu0
    %v147 = vadd.f32 %v68, %v146
    %v148 = vpop.f32.mrb[0].mxu0
    %149 = vdwg.mxu0
    %v150 = vmul.f32 %v147, %v147
    %v151 = vmul.f32 %v147, %v150
    %v152 = vmul.f32 %v151, 0.044715
    %v153 = vadd.f32 %v147, %v152
    %v154 = vmul.f32 %v153, 0.7978846
    %v155 = vtanh.pop %v154
    %v156 = vadd.f32 %v155, 1.0
    %v157 = vmul.f32 %v156, 0.5
    %v158 = vmul.f32 %v147, %v157
    %v159 = vld [vmem:[#allocation2 + $0x108] sm:$0xff]
    %v160 = vld [vmem:[#allocation2 + $0x110] sm:$0xff]
    %v161 = vld [vmem:[#allocation2 + $0x118] sm:$0xff]
    %v162 = vld [vmem:[#allocation2 + $0x120] sm:$0xff]
    %v163 = vld [vmem:[#allocation2 + $0x128] sm:$0xff]
    %v164 = vld [vmem:[#allocation2 + $0x130] sm:$0xff]
    %v165 = vld [vmem:[#allocation2 + $0x138] sm:$0xff]
    %v166 = vld [vmem:[#allocation2 + $0x140] sm:$0xff]
    %v167 = vld [vmem:[#allocation2 + $0x148] sm:$0xff]
    %v168 = vld [vmem:[#allocation2 + $0x150] sm:$0xff]
    %v169 = vld [vmem:[#allocation2 + $0x158] sm:$0xff]
    %v170 = vld [vmem:[#allocation2 + $0x160] sm:$0x1]
    %v171 = vlaneseq
    %v172 = vshrl.u32 %v171, 7
    %v173 = vsub.s32 0, %v172
    %v174 = vrot.slane %v170, %v173
    %vm175 = vcmask 719872
    %v177 = vsel %vm175, %v158, 0
    %179 = vmatprep.subr.mxu0 0.0
    %180 = vmatpush1.msra.mxu0 %v159
    %181 = vmatprep.subr.mxu0 0.0
    %182 = vmatpush1.msra.mxu0 %v160
    %183 = vmatprep.subr.mxu0 0.0
    %184 = vmatpush1.msra.mxu0 %v161
    %185 = vmatprep.subr.mxu0 0.0
    %186 = vmatpush1.msra.mxu0 %v162
    %187 = vmatprep.subr.mxu0 0.0
    %188 = vmatpush1.msra.mxu0 %v163
    %189 = vmatprep.subr.mxu0 0.0
    %190 = vmatpush1.msra.mxu0 %v164
    %191 = vmatprep.subr.mxu0 0.0
    %192 = vmatpush1.msra.mxu0 %v165
    %193 = vmatprep.subr.mxu0 0.0
    %194 = vmatpush1.msra.mxu0 %v166
    %195 = vmatprep.subr.mxu0 0.0
    %196 = vmatpush1.msra.mxu0 %v167
    %197 = vmatprep.subr.mxu0 0.0
    %198 = vmatpush1.msra.mxu0 %v168
    %199 = vmatprep.subr.mxu0 0.0
    %200 = vmatpush1.msra.mxu0 %v169
    %201 = vmatprep.subr.mxu0 0.0
    %202 = vmatpush1.msra.mxu0 0.0
    %203 = vmatprep.subr.mxu0 0.0
    %204 = vmatpush1.msra.mxu0 0.0
    %205 = vmatprep.subr.mxu0 0.0
    %206 = vmatpush1.msra.mxu0 0.0
    %207 = vmatprep.subr.mxu0 0.0
    %208 = vmatpush1.msra.mxu0 0.0
    %209 = vmatprep.subr.mxu0 0.0
    %210 = vmatpush1.msra.mxu0 0.0
    %211 = vmatprep.subr.mxu0 0.0
    %212 = vmatpush1.msra.mxu0 0.0
    %213 = vmatprep.subr.mxu0 0.0
    %214 = vmatpush1.msra.mxu0 0.0
    %215 = vmatprep.subr.mxu0 0.0
    %216 = vmatpush1.msra.mxu0 0.0
    %217 = vmatprep.subr.mxu0 0.0
    %218 = vmatpush1.msra.mxu0 0.0
    %219 = vmatprep.subr.mxu0 0.0
    %220 = vmatpush1.msra.mxu0 0.0
    %221 = vmatprep.subr.mxu0 0.0
    %222 = vmatpush1.msra.mxu0 0.0
    %223 = vmatprep.subr.mxu0 0.0
    %224 = vmatpush1.msra.mxu0 0.0
    %225 = vmatprep.subr.mxu0 0.0
    %226 = vmatpush1.msra.mxu0 0.0
    %227 = vmatprep.subr.mxu0 0.0
    %228 = vmatpush1.msra.mxu0 0.0
    %229 = vmatprep.subr.mxu0 0.0
    %230 = vmatpush1.msra.mxu0 0.0
    %231 = vmatprep.subr.mxu0 0.0
    %232 = vmatpush1.msra.mxu0 0.0
    %233 = vmatprep.subr.mxu0 0.0
    %234 = vmatpush1.msra.mxu0 0.0
    %235 = vmatprep.subr.mxu0 0.0
    %236 = vmatpush1.msra.mxu0 0.0
    %237 = vmatprep.subr.mxu0 0.0
    %238 = vmatpush1.msra.mxu0 0.0
    %239 = vmatprep.subr.mxu0 0.0
    %240 = vmatpush1.msra.mxu0 0.0
    %241 = vmatprep.subr.mxu0 0.0
    %242 = vmatpush1.msra.mxu0 0.0
    %243 = vmatprep.mubr.f32.mxu0 0.0
    %244 = vmatmul.mubr.f32.gmra.mrb[0].mxu0 %v177
    %v245 = vpop.f32.mrb[0].mxu0
    %v246 = vadd.f32 %v174, %v245
    %v247 = vpop.f32.mrb[0].mxu0
    %248 = vdwg.mxu0
    %v249 = vld [vmem:[#allocation2 + $0x168] sm:$0xff]
    %v250 = vld [vmem:[#allocation2 + $0x170] sm:$0xff]
    %v251 = vld [vmem:[#allocation2 + $0x178] sm:$0xff]
    %v252 = vld [vmem:[#allocation2 + $0x180] sm:$0xff]
    %v253 = vld [vmem:[#allocation2 + $0x188] sm:$0x1]
    %v254 = vlaneseq
    %v255 = vshrl.u32 %v254, 7
    %v256 = vsub.s32 0, %v255
    %v257 = vrot.slane %v253, %v256
    %vm258 = vcmask 261120
    %v260 = vsel %vm258, %v246, 0
    %262 = vmatprep.subr.mxu0 0.0
    %263 = vmatpush1.msra.mxu0 %v249
    %264 = vmatprep.subr.mxu0 0.0
    %265 = vmatpush1.msra.mxu0 %v250
    %266 = vmatprep.subr.mxu0 0.0
    %267 = vmatpush1.msra.mxu0 %v251
    %268 = vmatprep.subr.mxu0 0.0
    %269 = vmatpush1.msra.mxu0 %v252
    %270 = vmatprep.subr.mxu0 0.0
    %271 = vmatpush1.msra.mxu0 0.0
    %272 = vmatprep.subr.mxu0 0.0
    %273 = vmatpush1.msra.mxu0 0.0
    %274 = vmatprep.subr.mxu0 0.0
    %275 = vmatpush1.msra.mxu0 0.0
    %276 = vmatprep.subr.mxu0 0.0
    %277 = vmatpush1.msra.mxu0 0.0
    %278 = vmatprep.subr.mxu0 0.0
    %279 = vmatpush1.msra.mxu0 0.0
    %280 = vmatprep.subr.mxu0 0.0
    %281 = vmatpush1.msra.mxu0 0.0
    %282 = vmatprep.subr.mxu0 0.0
    %283 = vmatpush1.msra.mxu0 0.0
    %284 = vmatprep.subr.mxu0 0.0
    %285 = vmatpush1.msra.mxu0 0.0
    %286 = vmatprep.subr.mxu0 0.0
    %287 = vmatpush1.msra.mxu0 0.0
    %288 = vmatprep.subr.mxu0 0.0
    %289 = vmatpush1.msra.mxu0 0.0
    %290 = vmatprep.subr.mxu0 0.0
    %291 = vmatpush1.msra.mxu0 0.0
    %292 = vmatprep.subr.mxu0 0.0
    %293 = vmatpush1.msra.mxu0 0.0
    %294 = vmatprep.subr.mxu0 0.0
    %295 = vmatpush1.msra.mxu0 0.0
    %296 = vmatprep.subr.mxu0 0.0
    %297 = vmatpush1.msra.mxu0 0.0
    %298 = vmatprep.subr.mxu0 0.0
    %299 = vmatpush1.msra.mxu0 0.0
    %300 = vmatprep.subr.mxu0 0.0
    %301 = vmatpush1.msra.mxu0 0.0
    %302 = vmatprep.subr.mxu0 0.0
    %303 = vmatpush1.msra.mxu0 0.0
    %304 = vmatprep.subr.mxu0 0.0
    %305 = vmatpush1.msra.mxu0 0.0
    %306 = vmatprep.subr.mxu0 0.0
    %307 = vmatpush1.msra.mxu0 0.0
    %308 = vmatprep.subr.mxu0 0.0
    %309 = vmatpush1.msra.mxu0 0.0
    %310 = vmatprep.subr.mxu0 0.0
    %311 = vmatpush1.msra.mxu0 0.0
    %312 = vmatprep.subr.mxu0 0.0
    %313 = vmatpush1.msra.mxu0 0.0
    %314 = vmatprep.subr.mxu0 0.0
    %315 = vmatpush1.msra.mxu0 0.0
    %316 = vmatprep.subr.mxu0 0.0
    %317 = vmatpush1.msra.mxu0 0.0
    %318 = vmatprep.subr.mxu0 0.0
    %319 = vmatpush1.msra.mxu0 0.0
    %320 = vmatprep.subr.mxu0 0.0
    %321 = vmatpush1.msra.mxu0 0.0
    %322 = vmatprep.subr.mxu0 0.0
    %323 = vmatpush1.msra.mxu0 0.0
    %324 = vmatprep.subr.mxu0 0.0
    %325 = vmatpush1.msra.mxu0 0.0
    %326 = vmatprep.mubr.f32.mxu0 0.0
    %327 = vmatmul.mubr.f32.gmra.mrb[0].mxu0 %v260
    %v328 = vpop.f32.mrb[0].mxu0
    %v329 = vadd.f32 %v257, %v328
    %v330 = vpop.f32.mrb[0].mxu0
    %331 = vdwg.mxu0
    %v332 = vmul.f32 %v329, %v329
    %v333 = vmul.f32 %v329, %v332
    %v334 = vmul.f32 %v333, 0.044715
    %v335 = vadd.f32 %v329, %v334
    %v336 = vmul.f32 %v335, 0.7978846
    %v337 = vtanh.pop %v336
    %v338 = vadd.f32 %v337, 1.0
    %v339 = vmul.f32 %v338, 0.5
    %v340 = vmul.f32 %v329, %v339
    %v341 = vld [vmem:[#allocation2 + $0x190] sm:$0xff]
    %v342 = vld [vmem:[#allocation2 + $0x198] sm:$0xff]
    %v343 = vld [vmem:[#allocation2 + $0x1a0] sm:$0xff]
    %v344 = vld [vmem:[#allocation2 + $0x1a8] sm:$0x1]
    %v345 = vlaneseq
    %v346 = vshrl.u32 %v345, 7
    %v347 = vsub.s32 0, %v346
    %v348 = vrot.slane %v344, %v347
    %vm349 = vcmask 195584
    %v351 = vsel %vm349, %v340, 0
    %353 = vmatprep.subr.mxu0 0.0
    %354 = vmatpush1.msra.mxu0 %v341
    %355 = vmatprep.subr.mxu0 0.0
    %356 = vmatpush1.msra.mxu0 %v342
    %357 = vmatprep.subr.mxu0 0.0
    %358 = vmatpush1.msra.mxu0 %v343
    %359 = vmatprep.subr.mxu0 0.0
    %360 = vmatpush1.msra.mxu0 0.0
    %361 = vmatprep.subr.mxu0 0.0
    %362 = vmatpush1.msra.mxu0 0.0
    %363 = vmatprep.subr.mxu0 0.0
    %364 = vmatpush1.msra.mxu0 0.0
    %365 = vmatprep.subr.mxu0 0.0
    %366 = vmatpush1.msra.mxu0 0.0
    %367 = vmatprep.subr.mxu0 0.0
    %368 = vmatpush1.msra.mxu0 0.0
    %369 = vmatprep.subr.mxu0 0.0
    %370 = vmatpush1.msra.mxu0 0.0
    %371 = vmatprep.subr.mxu0 0.0
    %372 = vmatpush1.msra.mxu0 0.0
    %373 = vmatprep.subr.mxu0 0.0
    %374 = vmatpush1.msra.mxu0 0.0
    %375 = vmatprep.subr.mxu0 0.0
    %376 = vmatpush1.msra.mxu0 0.0
    %377 = vmatprep.subr.mxu0 0.0
    %378 = vmatpush1.msra.mxu0 0.0
    %379 = vmatprep.subr.mxu0 0.0
    %380 = vmatpush1.msra.mxu0 0.0
    %381 = vmatprep.subr.mxu0 0.0
    %382 = vmatpush1.msra.mxu0 0.0
    %383 = vmatprep.subr.mxu0 0.0
    %384 = vmatpush1.msra.mxu0 0.0
    %385 = vmatprep.subr.mxu0 0.0
    %386 = vmatpush1.msra.mxu0 0.0
    %387 = vmatprep.subr.mxu0 0.0
    %388 = vmatpush1.msra.mxu0 0.0
    %389 = vmatprep.subr.mxu0 0.0
    %390 = vmatpush1.msra.mxu0 0.0
    %391 = vmatprep.subr.mxu0 0.0
    %392 = vmatpush1.msra.mxu0 0.0
    %393 = vmatprep.subr.mxu0 0.0
    %394 = vmatpush1.msra.mxu0 0.0
    %395 = vmatprep.subr.mxu0 0.0
    %396 = vmatpush1.msra.mxu0 0.0
    %397 = vmatprep.subr.mxu0 0.0
    %398 = vmatpush1.msra.mxu0 0.0
    %399 = vmatprep.subr.mxu0 0.0
    %400 = vmatpush1.msra.mxu0 0.0
    %401 = vmatprep.subr.mxu0 0.0
    %402 = vmatpush1.msra.mxu0 0.0
    %403 = vmatprep.subr.mxu0 0.0
    %404 = vmatpush1.msra.mxu0 0.0
    %405 = vmatprep.subr.mxu0 0.0
    %406 = vmatpush1.msra.mxu0 0.0
    %407 = vmatprep.subr.mxu0 0.0
    %408 = vmatpush1.msra.mxu0 0.0
    %409 = vmatprep.subr.mxu0 0.0
    %410 = vmatpush1.msra.mxu0 0.0
    %411 = vmatprep.subr.mxu0 0.0
    %412 = vmatpush1.msra.mxu0 0.0
    %413 = vmatprep.subr.mxu0 0.0
    %414 = vmatpush1.msra.mxu0 0.0
    %415 = vmatprep.subr.mxu0 0.0
    %416 = vmatpush1.msra.mxu0 0.0
    %417 = vmatprep.mubr.f32.mxu0 0.0
    %418 = vmatmul.mubr.f32.gmra.mrb[0].mxu0 %v351
    %v419 = vpop.f32.mrb[0].mxu0
    %v420 = vadd.f32 %v348, %v419
    %v421 = vpop.f32.mrb[0].mxu0
    %422 = vdwg.mxu0
    %v423 = vmul.f32 %v420, %v420
    %vm424 = vcmask 123904
    %v425 = vsel %vm424, %v423, 0.0
    %426 = vadd.xlane.f32.xlu0 %v425
    %v427 = vpop.xlane.xlu0 %426
    %v428 = vrcp.pop 16.0
    %v429 = vmul.f32 %v427, %v428
    %v430 = vadd.f32 %v429, 1e-06
    %v431 = vrsqrt.pop %v430
    %v432 = vmul.f32 %v420, %v431
    %v433 = vld [vmem:[#allocation2 + $0x1b0] sm:$0x1]
    %v434 = vlaneseq
    %v435 = vshrl.u32 %v434, 7
    %v436 = vsub.s32 0, %v435
    %v437 = vrot.slane %v433, %v436
    %v438 = vmul.f32 %v432, %v437
    %v439 = vld [vmem:[#allocation2 + $0x1b8] sm:$0xff]
    %v440 = vld [vmem:[#allocation2 + $0x1c0] sm:$0xff]
    %v441 = vld [vmem:[#allocation2 + $0x1c8] sm:$0x1]
    %v442 = vlaneseq
    %v443 = vshrl.u32 %v442, 7
    %v444 = vsub.s32 0, %v443
    %v445 = vrot.slane %v441, %v444
    %vm446 = vcmask 130048
    %v448 = vsel %vm446, %v438, 0
    %450 = vmatprep.subr.mxu0 0.0
    %451 = vmatpush1.msra.mxu0 %v439
    %452 = vmatprep.subr.mxu0 0.0
    %453 = vmatpush1.msra.mxu0 %v440
    %454 = vmatprep.subr.mxu0 0.0
    %455 = vmatpush1.msra.mxu0 0.0
    %456 = vmatprep.subr.mxu0 0.0
    %457 = vmatpush1.msra.mxu0 0.0
    %458 = vmatprep.subr.mxu0 0.0
    %459 = vmatpush1.msra.mxu0 0.0
    %460 = vmatprep.subr.mxu0 0.0
    %461 = vmatpush1.msra.mxu0 0.0
    %462 = vmatprep.subr.mxu0 0.0
    %463 = vmatpush1.msra.mxu0 0.0
    %464 = vmatprep.subr.mxu0 0.0
    %465 = vmatpush1.msra.mxu0 0.0
    %466 = vmatprep.subr.mxu0 0.0
    %467 = vmatpush1.msra.mxu0 0.0
    %468 = vmatprep.subr.mxu0 0.0
    %469 = vmatpush1.msra.mxu0 0.0
    %470 = vmatprep.subr.mxu0 0.0
    %471 = vmatpush1.msra.mxu0 0.0
    %472 = vmatprep.subr.mxu0 0.0
    %473 = vmatpush1.msra.mxu0 0.0
    %474 = vmatprep.subr.mxu0 0.0
    %475 = vmatpush1.msra.mxu0 0.0
    %476 = vmatprep.subr.mxu0 0.0
    %477 = vmatpush1.msra.mxu0 0.0
    %478 = vmatprep.subr.mxu0 0.0
    %479 = vmatpush1.msra.mxu0 0.0
    %480 = vmatprep.subr.mxu0 0.0
    %481 = vmatpush1.msra.mxu0 0.0
    %482 = vmatprep.subr.mxu0 0.0
    %483 = vmatpush1.msra.mxu0 0.0
    %484 = vmatprep.subr.mxu0 0.0
    %485 = vmatpush1.msra.mxu0 0.0
    %486 = vmatprep.subr.mxu0 0.0
    %487 = vmatpush1.msra.mxu0 0.0
    %488 = vmatprep.subr.mxu0 0.0
    %489 = vmatpush1.msra.mxu0 0.0
    %490 = vmatprep.subr.mxu0 0.0
    %491 = vmatpush1.msra.mxu0 0.0
    %492 = vmatprep.subr.mxu0 0.0
    %493 = vmatpush1.msra.mxu0 0.0
    %494 = vmatprep.subr.mxu0 0.0
    %495 = vmatpush1.msra.mxu0 0.0
    %496 = vmatprep.subr.mxu0 0.0
    %497 = vmatpush1.msra.mxu0 0.0
    %498 = vmatprep.subr.mxu0 0.0
    %499 = vmatpush1.msra.mxu0 0.0
    %500 = vmatprep.subr.mxu0 0.0
    %501 = vmatpush1.msra.mxu0 0.0
    %502 = vmatprep.subr.mxu0 0.0
    %503 = vmatpush1.msra.mxu0 0.0
    %504 = vmatprep.subr.mxu0 0.0
    %505 = vmatpush1.msra.mxu0 0.0
    %506 = vmatprep.subr.mxu0 0.0
    %507 = vmatpush1.msra.mxu0 0.0
    %508 = vmatprep.subr.mxu0 0.0
    %509 = vmatpush1.msra.mxu0 0.0
    %510 = vmatprep.subr.mxu0 0.0
    %511 = vmatpush1.msra.mxu0 0.0
    %512 = vmatprep.subr.mxu0 0.0
    %513 = vmatpush1.msra.mxu0 0.0
    %514 = vmatprep.mubr.f32.mxu0 0.0
    %515 = vmatmul.mubr.f32.gmra.mrb[0].mxu0 %v448
    %v516 = vpop.f32.mrb[0].mxu0
    %v517 = vadd.f32 %v445, %v516
    %v518 = vpop.f32.mrb[0].mxu0
    %519 = vdwg.mxu0
    %v520 = vmul.f32 %v517, %v517
    %v521 = vmul.f32 %v517, %v520
    %v522 = vmul.f32 %v521, 0.044715
    %v523 = vadd.f32 %v517, %v522
    %v524 = vmul.f32 %v523, 0.7978846
    %v525 = vtanh.pop %v524
    %v526 = vadd.f32 %v525, 1.0
    %v527 = vmul.f32 %v526, 0.5
    %v528 = vmul.f32 %v517, %v527
    %v529 = vld [vmem:[#allocation2 + $0x1d0] sm:$0xff]
    %v530 = vld [vmem:[#allocation2 + $0x1d8] sm:$0x7]
    %v531 = vld [vmem:[#allocation2 + $0x1e0] sm:$0x1]
    %v532 = vlaneseq
    %v533 = vshrl.u32 %v532, 7
    %v534 = vsub.s32 0, %v533
    %v535 = vrot.slane %v531, %v534
    %vm536 = vcmask 89088
    %v538 = vsel %vm536, %v528, 0
    %vm540 = vcmask 1042432
    %v542 = vsel %vm540, %v530, 0
    %544 = vmatprep.subr.mxu0 0.0
    %545 = vmatpush1.msra.mxu0 %v529
    %546 = vmatprep.subr.mxu0 0.0
    %547 = vmatpush1.msra.mxu0 %v542
    %548 = vmatprep.subr.mxu0 0.0
    %549 = vmatpush1.msra.mxu0 0.0
    %550 = vmatprep.subr.mxu0 0.0
    %551 = vmatpush1.msra.mxu0 0.0
    %552 = vmatprep.subr.mxu0 0.0
    %553 = vmatpush1.msra.mxu0 0.0
    %554 = vmatprep.subr.mxu0 0.0
    %555 = vmatpush1.msra.mxu0 0.0
    %556 = vmatprep.subr.mxu0 0.0
    %557 = vmatpush1.msra.mxu0 0.0
    %558 = vmatprep.subr.mxu0 0.0
    %559 = vmatpush1.msra.mxu0 0.0
    %560 = vmatprep.subr.mxu0 0.0
    %561 = vmatpush1.msra.mxu0 0.0
    %562 = vmatprep.subr.mxu0 0.0
    %563 = vmatpush1.msra.mxu0 0.0
    %564 = vmatprep.subr.mxu0 0.0
    %565 = vmatpush1.msra.mxu0 0.0
    %566 = vmatprep.subr.mxu0 0.0
    %567 = vmatpush1.msra.mxu0 0.0
    %568 = vmatprep.subr.mxu0 0.0
    %569 = vmatpush1.msra.mxu0 0.0
    %570 = vmatprep.subr.mxu0 0.0
    %571 = vmatpush1.msra.mxu0 0.0
    %572 = vmatprep.subr.mxu0 0.0
    %573 = vmatpush1.msra.mxu0 0.0
    %574 = vmatprep.subr.mxu0 0.0
    %575 = vmatpush1.msra.mxu0 0.0
    %576 = vmatprep.subr.mxu0 0.0
    %577 = vmatpush1.msra.mxu0 0.0
    %578 = vmatprep.subr.mxu0 0.0
    %579 = vmatpush1.msra.mxu0 0.0
    %580 = vmatprep.subr.mxu0 0.0
    %581 = vmatpush1.msra.mxu0 0.0
    %582 = vmatprep.subr.mxu0 0.0
    %583 = vmatpush1.msra.mxu0 0.0
    %584 = vmatprep.subr.mxu0 0.0
    %585 = vmatpush1.msra.mxu0 0.0
    %586 = vmatprep.subr.mxu0 0.0
    %587 = vmatpush1.msra.mxu0 0.0
    %588 = vmatprep.subr.mxu0 0.0
    %589 = vmatpush1.msra.mxu0 0.0
    %590 = vmatprep.subr.mxu0 0.0
    %591 = vmatpush1.msra.mxu0 0.0
    %592 = vmatprep.subr.mxu0 0.0
    %593 = vmatpush1.msra.mxu0 0.0
    %594 = vmatprep.subr.mxu0 0.0
    %595 = vmatpush1.msra.mxu0 0.0
    %596 = vmatprep.subr.mxu0 0.0
    %597 = vmatpush1.msra.mxu0 0.0
    %598 = vmatprep.subr.mxu0 0.0
    %599 = vmatpush1.msra.mxu0 0.0
    %600 = vmatprep.subr.mxu0 0.0
    %601 = vmatpush1.msra.mxu0 0.0
    %602 = vmatprep.subr.mxu0 0.0
    %603 = vmatpush1.msra.mxu0 0.0
    %604 = vmatprep.subr.mxu0 0.0
    %605 = vmatpush1.msra.mxu0 0.0
    %606 = vmatprep.subr.mxu0 0.0
    %607 = vmatpush1.msra.mxu0 0.0
    %608 = vmatprep.mubr.f32.mxu0 0.0
    %609 = vmatmul.mubr.f32.gmra.mrb[0].mxu0 %v538
    %v610 = vpop.f32.mrb[0].mxu0
    %v611 = vadd.f32 %v535, %v610
    %v612 = vpop.f32.mrb[0].mxu0
    %613 = vdwg.mxu0
    %vm614 = vcmask 58368
    %615 = vst.msk [vmem:[#allocation5] sm:$0x3] %vm614, %v611
    // Predicated region
    $region18: #{the_model_forward.1} parent=1 // pred_check
      _
    $region19: #{the_model_forward.1} parent=1 // pred_check_branch
      %617 = sbr.rel (0) target = $region21
    $region20: #{the_model_forward.1} parent=1 // pred_region
      %s619 = ssub.s32 32, 32
      %620 = vsyncadd [#allocation4], %s619
      %s622 = sshll.u32 [#allocation5], 4
      %s623 = int_to_ptr.vmem [resolvable:$true] %s622
      %625 = dma.vmem_to_hbm [thread:$0]  %s623, 32, %s3, [#allocation4]
    $region21: #{the_model_forward.1} parent=1 // pred_fallthru
      _
    // Predicated region
    $region22: #{the_model_forward.1} parent=1 // pred_check
      _
    $region23: #{the_model_forward.1} parent=1 // pred_check_branch
      %627 = sbr.rel (0) target = $region25
    $region24: #{the_model_forward.1} parent=1 // pred_region
      %628 = dma.done [#allocation4], 32
    $region25: #{the_model_forward.1} parent=1 // pred_fallthru
      _
    %629 = vsyncpa [#allocation3], 1
    %630 = vsyncpa [#allocation4], 1

</llo_original>
